<compile_context>
chip_gen: v7x
topology: tpu7x:2x2x1
jax: 0.10.0
libtpu: 0.0.40
codegen_flags: <defaults>
</compile_context>

<pallas_src>
import jax
import jax.numpy as jnp
from jax.experimental import pallas as pl
from jax.experimental.pallas import tpu as pltpu

LANE = 128
SUBLANE = 8


def _round_up(n, m):
    return ((n + m - 1) // m) * m


def gated_fusion_kernel(x_ref, y_ref, wx_ref, bx_ref, wy_ref, by_ref,
                        wo_ref, bo_ref, out_ref):
    # Activations / weights arrive in bf16; accumulate on the MXU in f32.
    x = x_ref[...]
    y = y_ref[...]

    out_x = jnp.dot(x, wx_ref[...], preferred_element_type=jnp.float32) + bx_ref[...]
    out_y = jnp.dot(y, wy_ref[...], preferred_element_type=jnp.float32) + by_ref[...]

    # x_gate=True branch: sigmoid gate on out_x, elementwise multiply (f32 VPU/EUP).
    gate = jax.nn.sigmoid(out_x)
    fused = (gate * out_y).astype(wo_ref.dtype)   # back to bf16 for the final matmul

    out = jnp.dot(fused, wo_ref[...], preferred_element_type=jnp.float32) + bo_ref[...]
    out_ref[...] = out.astype(out_ref.dtype)


def gated_fusion(x, y, params, *, block_b=None, compute_dtype=jnp.bfloat16,
                 vmem_budget_bytes=20 << 20):
    """params: wx (Din,D), bx (1,D), wy (Din,D), by (1,D), wo (D,Dout), bo (1,Dout).
       Returns (x, y, output) like the PyTorch module."""
    wx, bx = params["wx"], params["bx"]
    wy, by = params["wy"], params["by"]
    wo, bo = params["wo"], params["bo"]

    B, d_in = x.shape
    d_hid = wx.shape[1]
    d_out = wo.shape[1]
    cd = jnp.dtype(compute_dtype).itemsize

    # --- lane-dense feature dims (pad hidden / output feature axes to 128) ---
    d_hid_p = _round_up(d_hid, LANE)
    d_out_p = _round_up(d_out, LANE)

    def pad2(a, rows, cols, dtype):
        a = a.astype(dtype)
        return jnp.pad(a, ((0, rows - a.shape[0]), (0, cols - a.shape[1])))

    wx_p = pad2(wx, d_in, d_hid_p, compute_dtype)
    wy_p = pad2(wy, d_in, d_hid_p, compute_dtype)
    wo_p = pad2(wo, d_hid_p, d_out_p, compute_dtype)
    bx_p = pad2(bx, 1, d_hid_p, jnp.float32)
    by_p = pad2(by, 1, d_hid_p, jnp.float32)
    bo_p = pad2(bo, 1, d_out_p, jnp.float32)

    # --- batch tile sizing against a conservative VMEM budget (v7x-safe) ---
    # per batch row in VMEM: double-buffered bf16 x & y tiles + f32 out tile
    per_row = 2 * (2 * d_in * cd) + 2 * (d_out_p * 4)
    static = (2 * d_in * d_hid_p + d_hid_p * d_out_p) * cd + (2 * d_hid_p + d_out_p) * 4
    if block_b is None:
        avail = max(vmem_budget_bytes - static, 1 << 20)
        block_b = int(avail // per_row)
        block_b = max(SUBLANE, min(1024, (block_b // SUBLANE) * SUBLANE))
    block_b = min(block_b, _round_up(B, SUBLANE))
    b_pad = _round_up(B, block_b)

    x_p = jnp.pad(x.astype(compute_dtype), ((0, b_pad - B), (0, 0)))
    y_p = jnp.pad(y.astype(compute_dtype), ((0, b_pad - B), (0, 0)))

    est_vmem = static + block_b * per_row
    vmem_limit = int(min(max(2 * est_vmem, 32 << 20), 64 << 20))

    grid = (b_pad // block_b,)

    act_spec = lambda: pl.BlockSpec((block_b, d_in), lambda i: (i, 0))
    const_spec = lambda shape: pl.BlockSpec(shape, lambda i: (0, 0))

    out_p = pl.pallas_call(
        gated_fusion_kernel,
        out_shape=jax.ShapeDtypeStruct((b_pad, d_out_p), jnp.float32),
        grid=grid,
        in_specs=[
            act_spec(),                      # x tile
            act_spec(),                      # y tile
            const_spec((d_in, d_hid_p)),     # Wx (resident)
            const_spec((1, d_hid_p)),        # bx (resident)
            const_spec((d_in, d_hid_p)),     # Wy (resident)
            const_spec((1, d_hid_p)),        # by (resident)
            const_spec((d_hid_p, d_out_p)),  # Wo (resident)
            const_spec((1, d_out_p)),        # bo (resident)
        ],
        out_specs=pl.BlockSpec((block_b, d_out_p), lambda i: (i, 0)),
        compiler_params=pltpu.CompilerParams(
            dimension_semantics=("parallel",),
            vmem_limit_bytes=vmem_limit,
        ),
    )(x_p, y_p, wx_p, bx_p, wy_p, by_p, wo_p, bo_p)

    output = out_p[:B, :d_out]
    return (x, y, output)


def init_params(key, input_dim, dim, output_dim):
    """Deterministic synthetic init (nn.Linear-style uniform fan-in scaling)."""
    ks = jax.random.split(key, 6)

    def lin(kw, kb, fan_in, fan_out):
        bound = 1.0 / jnp.sqrt(fan_in)
        w = jax.random.uniform(kw, (fan_in, fan_out), jnp.float32, -bound, bound)
        b = jax.random.uniform(kb, (1, fan_out), jnp.float32, -bound, bound)
        return w, b

    wx, bx = lin(ks[0], ks[1], input_dim, dim)
    wy, by = lin(ks[2], ks[3], input_dim, dim)
    wo, bo = lin(ks[4], ks[5], dim, output_dim)
    return {"wx": wx, "bx": bx, "wy": wy, "by": by, "wo": wo, "bo": bo}


def reference(x, y, params):
    out_x = x @ params["wx"] + params["bx"]
    out_y = y @ params["wy"] + params["by"]
    gate = jax.nn.sigmoid(out_x)
    return (gate * out_y) @ params["wo"] + params["bo"]


if __name__ == "__main__":
    # Small shapes consistent with the module: batch=8, input_dim=32, dim=32, output_dim=16
    # (For real benchmarking use batch in the thousands; at this size launch overhead dominates.)
    B, INPUT_DIM, DIM, OUTPUT_DIM = 8, 32, 32, 16

    key = jax.random.PRNGKey(0)
    kx, ky, kp = jax.random.split(key, 3)
    x = jax.random.normal(kx, (B, INPUT_DIM), jnp.float32)
    y = jax.random.normal(ky, (B, INPUT_DIM), jnp.float32)
    params = init_params(kp, INPUT_DIM, DIM, OUTPUT_DIM)

    x_out, y_out, output = gated_fusion(x, y, params)
    jax.block_until_ready(output)

    ref = reference(x, y, params)
    # bf16 matmul operands -> loosened tolerance vs the f32 reference.
    assert output.shape == (B, OUTPUT_DIM)
    assert x_out.shape == (B, INPUT_DIM) and y_out.shape == (B, INPUT_DIM)
    assert jnp.allclose(output, ref, atol=3e-2, rtol=3e-2), "mismatch vs reference"

    print("KERNEL_OK")
</pallas_src>

<mosaic_0001>
module attributes {stable_mosaic.version = 11 : i64} {
  func.func @gated_fusion_kernel(%arg0: i32, %arg1: memref<8x32xbf16, #tpu.memory_space<vmem>>, %arg2: memref<8x32xbf16, #tpu.memory_space<vmem>>, %arg3: memref<32x128xbf16, #tpu.memory_space<vmem>>, %arg4: memref<1x128xf32, #tpu.memory_space<vmem>>, %arg5: memref<32x128xbf16, #tpu.memory_space<vmem>>, %arg6: memref<1x128xf32, #tpu.memory_space<vmem>>, %arg7: memref<128x128xbf16, #tpu.memory_space<vmem>>, %arg8: memref<1x128xf32, #tpu.memory_space<vmem>>, %arg9: memref<8x128xf32, #tpu.memory_space<vmem>>) attributes {dimension_semantics = [#tpu.dimension_semantics<parallel>], iteration_bounds = array<i64: 1>, scalar_prefetch = 0 : i64, scratch_operands = 0 : i64, tpu.core_type = #tpu.core_type<tc>, window_params = [{transform_indices = @transform_0, window_bounds = array<i64: 8, 32>}, {transform_indices = @transform_1, window_bounds = array<i64: 8, 32>}, {pipeline_mode = #tpu.pipeline_mode<synchronous>, transform_indices = @transform_2, window_bounds = array<i64: 32, 128>}, {pipeline_mode = #tpu.pipeline_mode<synchronous>, transform_indices = @transform_3, window_bounds = array<i64: 1, 128>}, {pipeline_mode = #tpu.pipeline_mode<synchronous>, transform_indices = @transform_4, window_bounds = array<i64: 32, 128>}, {pipeline_mode = #tpu.pipeline_mode<synchronous>, transform_indices = @transform_5, window_bounds = array<i64: 1, 128>}, {pipeline_mode = #tpu.pipeline_mode<synchronous>, transform_indices = @transform_6, window_bounds = array<i64: 128, 128>}, {pipeline_mode = #tpu.pipeline_mode<synchronous>, transform_indices = @transform_7, window_bounds = array<i64: 1, 128>}, {transform_indices = @transform_8, window_bounds = array<i64: 8, 128>}]} {
    %c0 = arith.constant 0 : index
    %c0_0 = arith.constant 0 : index
    %0 = vector.load %arg1[%c0, %c0_0] : memref<8x32xbf16, #tpu.memory_space<vmem>>, vector<8x32xbf16>
    %c0_1 = arith.constant 0 : index
    %c0_2 = arith.constant 0 : index
    %1 = vector.load %arg2[%c0_1, %c0_2] : memref<8x32xbf16, #tpu.memory_space<vmem>>, vector<8x32xbf16>
    %c0_3 = arith.constant 0 : index
    %c0_4 = arith.constant 0 : index
    %2 = vector.load %arg3[%c0_3, %c0_4] : memref<32x128xbf16, #tpu.memory_space<vmem>>, vector<32x128xbf16>
    %cst = arith.constant dense<0.000000e+00> : vector<8x128xf32>
    %3 = tpu.matmul %0, %2, %cst {dimension_numbers = #tpu.dot_dimension_numbers<[1], [0], [0], [1], [0, 0, 1, 1], [], []>} : vector<8x32xbf16>, vector<32x128xbf16>, vector<8x128xf32> -> vector<8x128xf32>
    %c0_5 = arith.constant 0 : index
    %c0_6 = arith.constant 0 : index
    %4 = vector.load %arg4[%c0_5, %c0_6] : memref<1x128xf32, #tpu.memory_space<vmem>>, vector<1x128xf32>
    %5 = vector.broadcast %4 : vector<1x128xf32> to vector<8x128xf32>
    %6 = arith.addf %3, %5 : vector<8x128xf32>
    %c0_7 = arith.constant 0 : index
    %c0_8 = arith.constant 0 : index
    %7 = vector.load %arg5[%c0_7, %c0_8] : memref<32x128xbf16, #tpu.memory_space<vmem>>, vector<32x128xbf16>
    %cst_9 = arith.constant dense<0.000000e+00> : vector<8x128xf32>
    %8 = tpu.matmul %1, %7, %cst_9 {dimension_numbers = #tpu.dot_dimension_numbers<[1], [0], [0], [1], [0, 0, 1, 1], [], []>} : vector<8x32xbf16>, vector<32x128xbf16>, vector<8x128xf32> -> vector<8x128xf32>
    %c0_10 = arith.constant 0 : index
    %c0_11 = arith.constant 0 : index
    %9 = vector.load %arg6[%c0_10, %c0_11] : memref<1x128xf32, #tpu.memory_space<vmem>>, vector<1x128xf32>
    %10 = vector.broadcast %9 : vector<1x128xf32> to vector<8x128xf32>
    %11 = arith.addf %8, %10 : vector<8x128xf32>
    %12 = arith.negf %6 : vector<8x128xf32>
    %13 = math.exp %12 : vector<8x128xf32>
    %cst_12 = arith.constant 1.000000e+00 : f32
    %14 = vector.broadcast %cst_12 : f32 to vector<8x128xf32>
    %15 = arith.addf %14, %13 : vector<8x128xf32>
    %16 = arith.divf %14, %15 : vector<8x128xf32>
    %17 = arith.mulf %16, %11 : vector<8x128xf32>
    %18 = arith.truncf %17 : vector<8x128xf32> to vector<8x128xbf16>
    %c0_13 = arith.constant 0 : index
    %c0_14 = arith.constant 0 : index
    %19 = vector.load %arg7[%c0_13, %c0_14] : memref<128x128xbf16, #tpu.memory_space<vmem>>, vector<128x128xbf16>
    %cst_15 = arith.constant dense<0.000000e+00> : vector<8x128xf32>
    %20 = tpu.matmul %18, %19, %cst_15 {dimension_numbers = #tpu.dot_dimension_numbers<[1], [0], [0], [1], [0, 0, 1, 1], [], []>} : vector<8x128xbf16>, vector<128x128xbf16>, vector<8x128xf32> -> vector<8x128xf32>
    %c0_16 = arith.constant 0 : index
    %c0_17 = arith.constant 0 : index
    %21 = vector.load %arg8[%c0_16, %c0_17] : memref<1x128xf32, #tpu.memory_space<vmem>>, vector<1x128xf32>
    %22 = vector.broadcast %21 : vector<1x128xf32> to vector<8x128xf32>
    %23 = arith.addf %20, %22 : vector<8x128xf32>
    %c0_18 = arith.constant 0 : index
    %c0_19 = arith.constant 0 : index
    %24 = vector.load %arg9[%c0_18, %c0_19] : memref<8x128xf32, #tpu.memory_space<vmem>>, vector<8x128xf32>
    tpu.vector_store %arg9[%c0_18, %c0_19], %23 {strides = array<i32>} : memref<8x128xf32, #tpu.memory_space<vmem>>, vector<8x128xf32>,
    return
  }
  func.func @transform_0(%arg0: i32) -> (i32, i32) {
    %c0_i32 = arith.constant 0 : i32
    %c0_i32_0 = arith.constant 0 : i32
    return %arg0, %c0_i32 : i32, i32
  }
  func.func @transform_1(%arg0: i32) -> (i32, i32) {
    %c0_i32 = arith.constant 0 : i32
    %c0_i32_0 = arith.constant 0 : i32
    return %arg0, %c0_i32 : i32, i32
  }
  func.func @transform_2(%arg0: i32) -> (i32, i32) {
    %c0_i32 = arith.constant 0 : i32
    %c0_i32_0 = arith.constant 0 : i32
    %c0_i32_1 = arith.constant 0 : i32
    return %c0_i32, %c0_i32_0 : i32, i32
  }
  func.func @transform_3(%arg0: i32) -> (i32, i32) {
    %c0_i32 = arith.constant 0 : i32
    %c0_i32_0 = arith.constant 0 : i32
    %c0_i32_1 = arith.constant 0 : i32
    return %c0_i32, %c0_i32_0 : i32, i32
  }
  func.func @transform_4(%arg0: i32) -> (i32, i32) {
    %c0_i32 = arith.constant 0 : i32
    %c0_i32_0 = arith.constant 0 : i32
    %c0_i32_1 = arith.constant 0 : i32
    return %c0_i32, %c0_i32_0 : i32, i32
  }
  func.func @transform_5(%arg0: i32) -> (i32, i32) {
    %c0_i32 = arith.constant 0 : i32
    %c0_i32_0 = arith.constant 0 : i32
    %c0_i32_1 = arith.constant 0 : i32
    return %c0_i32, %c0_i32_0 : i32, i32
  }
  func.func @transform_6(%arg0: i32) -> (i32, i32) {
    %c0_i32 = arith.constant 0 : i32
    %c0_i32_0 = arith.constant 0 : i32
    %c0_i32_1 = arith.constant 0 : i32
    return %c0_i32, %c0_i32_0 : i32, i32
  }
  func.func @transform_7(%arg0: i32) -> (i32, i32) {
    %c0_i32 = arith.constant 0 : i32
    %c0_i32_0 = arith.constant 0 : i32
    %c0_i32_1 = arith.constant 0 : i32
    return %c0_i32, %c0_i32_0 : i32, i32
  }
  func.func @transform_8(%arg0: i32) -> (i32, i32) {
    %c0_i32 = arith.constant 0 : i32
    %c0_i32_0 = arith.constant 0 : i32
    return %arg0, %c0_i32 : i32, i32
  }
}

</mosaic_0001>

<llo_original>
// kernel: tpu_custom_call.1
$region0: #{tpu_custom_call.1}
  #allocation0 [shape = 'u32[]', space=smem, size = 0x4, offset = 0x4, fixed_abs, tag = 'smem constant byte address 0x4 - core index']
  #allocation1 [shape = 'u32[144,128]{1,0:T(1,128)}', space=vmem, size = 0x12000, scoped, tag = 'internal scratch']
  %s0 = inlined_call_operand.hbm [shape: bf16[8,32], index: 0, kind: input, shape index: {}]
  %s1 = inlined_call_operand.hbm [shape: bf16[8,32], index: 1, kind: input, shape index: {}]
  %s2 = inlined_call_operand.hbm [shape: bf16[32,128], index: 2, kind: input, shape index: {}]
  %s3 = inlined_call_operand.vmem [shape: f32[1,128], index: 3, kind: input, shape index: {}]
  %s4 = inlined_call_operand.hbm [shape: bf16[32,128], index: 4, kind: input, shape index: {}]
  %s5 = inlined_call_operand.vmem [shape: f32[1,128], index: 5, kind: input, shape index: {}]
  %s6 = inlined_call_operand.hbm [shape: bf16[128,128], index: 6, kind: input, shape index: {}]
  %s7 = inlined_call_operand.vmem [shape: f32[1,128], index: 7, kind: input, shape index: {}]
  %s8 = inlined_call_operand.hbm [shape: f32[8,128], index: 8, kind: output, shape index: {}]
  %s9 = sld [smem:[#allocation0]]
  $region62: #{tpu_custom_call.1} parent=0
    _
  %s11 = ssub.s32 1, %s9
  %s12 = scalar_select 0, %s11, %s9
  $region1: #{tpu_custom_call.1} parent=0
    #allocation2 [shape = 'u8[2048]{0}', space=vmem, size = 0x800, scoped, tag = 'input window, operand 0, single buffered']
    #allocation3 [shape = 's32[1]{0}', space=sflag, size = 0x4, scoped, tag = 'scoped memory for tpu_custom_call.1']
    #allocation4 [shape = 's32[1]{0}', space=sflag, size = 0x4, scoped, tag = 'scoped memory for tpu_custom_call.1']
    #allocation5 [shape = 'u8[2048]{0}', space=vmem, size = 0x800, scoped, tag = 'input window, operand 1, single buffered']
    #allocation6 [shape = 's32[1]{0}', space=sflag, size = 0x4, scoped, tag = 'scoped memory for tpu_custom_call.1']
    #allocation7 [shape = 'u8[8192]{0}', space=vmem, size = 0x2000, scoped, tag = 'input window, operand 2, single buffered']
    #allocation8 [shape = 'u8[8192]{0}', space=vmem, size = 0x2000, scoped, tag = 'input window, operand 4, single buffered']
    #allocation9 [shape = 's32[1]{0}', space=sflag, size = 0x4, scoped, tag = 'scoped memory for tpu_custom_call.1']
    #allocation10 [shape = 'u8[32768]{0}', space=vmem, size = 0x8000, scoped, tag = 'input window, operand 6, single buffered']
    #allocation11 [shape = 'u8[4096]{0}', space=vmem, size = 0x1000, scoped, tag = 'output window, operand 0, single buffered']
    %13 = vsyncpa [#allocation3], 0
    %14 = vsyncpa [#allocation6], 0
    %15 = vsyncpa [#allocation9], 0
    %16 = vsyncpa [#allocation4], 0
    // Predicated region
    $region2: #{tpu_custom_call.1} parent=1 // pred_check
      _
    $region3: #{tpu_custom_call.1} parent=1 // pred_check_branch
      %18 = sbr.rel (0) target = $region5
    $region4: #{tpu_custom_call.1} parent=1 // pred_region
      %s20 = ssub.s32 64, 64
      %21 = vsyncadd [#allocation3], %s20
      %s23 = sshll.u32 [#allocation2], 4
      %s24 = int_to_ptr.vmem [resolvable:$true] %s23
      %26 = dma.hbm_to_vmem [thread:$0]  %s0, 64, %s24, [#allocation3]
    $region5: #{tpu_custom_call.1} parent=1 // pred_fallthru
      _
    // Predicated region
    $region6: #{tpu_custom_call.1} parent=1 // pred_check
      _
    $region7: #{tpu_custom_call.1} parent=1 // pred_check_branch
      %28 = sbr.rel (0) target = $region9
    $region8: #{tpu_custom_call.1} parent=1 // pred_region
      %s30 = ssub.s32 64, 64
      %31 = vsyncadd [#allocation6], %s30
      %s33 = sshll.u32 [#allocation5], 4
      %s34 = int_to_ptr.vmem [resolvable:$true] %s33
      %36 = dma.hbm_to_vmem [thread:$0]  %s1, 64, %s34, [#allocation6]
    $region9: #{tpu_custom_call.1} parent=1 // pred_fallthru
      _
    // Predicated region
    $region10: #{tpu_custom_call.1} parent=1 // pred_check
      _
    $region11: #{tpu_custom_call.1} parent=1 // pred_check_branch
      %38 = sbr.rel (0) target = $region13
    $region12: #{tpu_custom_call.1} parent=1 // pred_region
      %s40 = ssub.s32 256, 256
      %41 = vsyncadd [#allocation6], %s40
      %s42 = sshll.u32 [#allocation7], 4
      %s43 = int_to_ptr.vmem [resolvable:$true] %s42
      %48 = dma.hbm_to_vmem [thread:$0]  %s2, 256, %s43, [#allocation6], 64, 64, 4
    $region13: #{tpu_custom_call.1} parent=1 // pred_fallthru
      _
    // Predicated region
    $region14: #{tpu_custom_call.1} parent=1 // pred_check
      _
    $region15: #{tpu_custom_call.1} parent=1 // pred_check_branch
      %50 = sbr.rel (0) target = $region17
    $region16: #{tpu_custom_call.1} parent=1 // pred_region
      _
    $region17: #{tpu_custom_call.1} parent=1 // pred_fallthru
      _
    // Predicated region
    $region18: #{tpu_custom_call.1} parent=1 // pred_check
      _
    $region19: #{tpu_custom_call.1} parent=1 // pred_check_branch
      %52 = sbr.rel (0) target = $region21
    $region20: #{tpu_custom_call.1} parent=1 // pred_region
      %s54 = ssub.s32 256, 256
      %55 = vsyncadd [#allocation9], %s54
      %s56 = sshll.u32 [#allocation8], 4
      %s57 = int_to_ptr.vmem [resolvable:$true] %s56
      %62 = dma.hbm_to_vmem [thread:$0]  %s4, 256, %s57, [#allocation9], 64, 64, 4
    $region21: #{tpu_custom_call.1} parent=1 // pred_fallthru
      _
    // Predicated region
    $region22: #{tpu_custom_call.1} parent=1 // pred_check
      _
    $region23: #{tpu_custom_call.1} parent=1 // pred_check_branch
      %64 = sbr.rel (0) target = $region25
    $region24: #{tpu_custom_call.1} parent=1 // pred_region
      _
    $region25: #{tpu_custom_call.1} parent=1 // pred_fallthru
      _
    // Predicated region
    $region26: #{tpu_custom_call.1} parent=1 // pred_check
      _
    $region27: #{tpu_custom_call.1} parent=1 // pred_check_branch
      %66 = sbr.rel (0) target = $region29
    $region28: #{tpu_custom_call.1} parent=1 // pred_region
      %s68 = ssub.s32 1024, 1024
      %69 = vsyncadd [#allocation9], %s68
      %s70 = sshll.u32 [#allocation10], 4
      %s71 = int_to_ptr.vmem [resolvable:$true] %s70
      %76 = dma.hbm_to_vmem [thread:$0]  %s6, 1024, %s71, [#allocation9], 64, 64, 4
    $region29: #{tpu_custom_call.1} parent=1 // pred_fallthru
      _
    // Predicated region
    $region30: #{tpu_custom_call.1} parent=1 // pred_check
      _
    $region31: #{tpu_custom_call.1} parent=1 // pred_check_branch
      %78 = sbr.rel (0) target = $region33
    $region32: #{tpu_custom_call.1} parent=1 // pred_region
      _
    $region33: #{tpu_custom_call.1} parent=1 // pred_fallthru
      _
    // Predicated region
    $region34: #{tpu_custom_call.1} parent=1 // pred_check
      _
    $region35: #{tpu_custom_call.1} parent=1 // pred_check_branch
      %80 = sbr.rel (0) target = $region37
    $region36: #{tpu_custom_call.1} parent=1 // pred_region
      %81 = dma.done [#allocation3], 64
    $region37: #{tpu_custom_call.1} parent=1 // pred_fallthru
      _
    // Predicated region
    $region38: #{tpu_custom_call.1} parent=1 // pred_check
      _
    $region39: #{tpu_custom_call.1} parent=1 // pred_check_branch
      %83 = sbr.rel (0) target = $region41
    $region40: #{tpu_custom_call.1} parent=1 // pred_region
      %84 = dma.done [#allocation6], 64
    $region41: #{tpu_custom_call.1} parent=1 // pred_fallthru
      _
    // Predicated region
    $region42: #{tpu_custom_call.1} parent=1 // pred_check
      _
    $region43: #{tpu_custom_call.1} parent=1 // pred_check_branch
      %86 = sbr.rel (0) target = $region45
    $region44: #{tpu_custom_call.1} parent=1 // pred_region
      %87 = dma.done [#allocation6], 256
    $region45: #{tpu_custom_call.1} parent=1 // pred_fallthru
      _
    // Predicated region
    $region46: #{tpu_custom_call.1} parent=1 // pred_check
      _
    $region47: #{tpu_custom_call.1} parent=1 // pred_check_branch
      %89 = sbr.rel (0) target = $region49
    $region48: #{tpu_custom_call.1} parent=1 // pred_region
      %90 = dma.done [#allocation9], 256
    $region49: #{tpu_custom_call.1} parent=1 // pred_fallthru
      _
    // Predicated region
    $region50: #{tpu_custom_call.1} parent=1 // pred_check
      _
    $region51: #{tpu_custom_call.1} parent=1 // pred_check_branch
      %92 = sbr.rel (0) target = $region53
    $region52: #{tpu_custom_call.1} parent=1 // pred_region
      %93 = dma.done [#allocation9], 1024
    $region53: #{tpu_custom_call.1} parent=1 // pred_fallthru
      _
    %v95 = vld [vmem:[#allocation2] sm:$0xf]
    %v96 = vld [vmem:[#allocation5] sm:$0xf]
    %v97 = vld [vmem:[#allocation7] sm:$0xf]
    %v98 = vld [vmem:[#allocation7 + $0x4] sm:$0xf]
    %v99 = vld [vmem:[#allocation7 + $0x8] sm:$0xf]
    %v100 = vld [vmem:[#allocation7 + $0xc] sm:$0xf]
    %v101 = vld [vmem:[%s3] sm:$0x1]
    %v103 = vlaneseq
    %v104 = vshrl.u32 %v103, 7
    %v105 = vsub.s32 0, %v104
    %v106 = vrot.slane %v101, %v105
    %v112 = vunpack.c.l.b16 %v97
    %v113 = vunpack.c.l.b16 %v98
    %v114 = vunpack.c.l.b16 %v99
    %v115 = vunpack.c.l.b16 %v100
    %v116 = vpack.c.b16 %v113, %v112
    %v117 = vpack.c.b16 %v115, %v114
    %vm120 = vcmask 261120
    %v122 = vsel %vm120, %v95, 0
    %124 = vmatprep.subr.bf16.mxu0 0
    %125 = vmatpush1.bf16.msra.mxu0 %v116
    %126 = vmatprep.subr.bf16.mxu0 0
    %127 = vmatpush1.bf16.msra.mxu0 %v117
    %128 = vmatprep.subr.bf16.mxu0 0
    %129 = vmatpush1.bf16.msra.mxu0 0
    %130 = vmatprep.subr.bf16.mxu0 0
    %131 = vmatpush1.bf16.msra.mxu0 0
    %132 = vmatprep.subr.bf16.mxu0 0
    %133 = vmatpush1.bf16.msra.mxu0 0
    %134 = vmatprep.subr.bf16.mxu0 0
    %135 = vmatpush1.bf16.msra.mxu0 0
    %136 = vmatprep.subr.bf16.mxu0 0
    %137 = vmatpush1.bf16.msra.mxu0 0
    %138 = vmatprep.subr.bf16.mxu0 0
    %139 = vmatpush1.bf16.msra.mxu0 0
    %140 = vmatprep.subr.bf16.mxu0 0
    %141 = vmatpush1.bf16.msra.mxu0 0
    %142 = vmatprep.subr.bf16.mxu0 0
    %143 = vmatpush1.bf16.msra.mxu0 0
    %144 = vmatprep.subr.bf16.mxu0 0
    %145 = vmatpush1.bf16.msra.mxu0 0
    %146 = vmatprep.subr.bf16.mxu0 0
    %147 = vmatpush1.bf16.msra.mxu0 0
    %148 = vmatprep.subr.bf16.mxu0 0
    %149 = vmatpush1.bf16.msra.mxu0 0
    %150 = vmatprep.subr.bf16.mxu0 0
    %151 = vmatpush1.bf16.msra.mxu0 0
    %152 = vmatprep.subr.bf16.mxu0 0
    %153 = vmatpush1.bf16.msra.mxu0 0
    %154 = vmatprep.subr.bf16.mxu0 0
    %155 = vmatpush1.bf16.msra.mxu0 0
    %156 = vmatprep.mubr.bf16.mxu0 0
    %157 = vmatmul.mubr.bf16.gmra.mrb[0].mxu0 %v122
    %v158 = vpop.f32.mrb[0].mxu0
    %v159 = vadd.f32 %v106, %v158
    %v160 = vpop.f32.mrb[0].mxu0
    %v161 = vpop.f32.mrb[0].mxu0
    %v162 = vpop.f32.mrb[0].mxu0
    %163 = vdwg.mxu0
    %v164 = vld [vmem:[#allocation8] sm:$0xf]
    %v165 = vld [vmem:[#allocation8 + $0x4] sm:$0xf]
    %v166 = vld [vmem:[#allocation8 + $0x8] sm:$0xf]
    %v167 = vld [vmem:[#allocation8 + $0xc] sm:$0xf]
    %v168 = vld [vmem:[%s5] sm:$0x1]
    %v170 = vlaneseq
    %v171 = vshrl.u32 %v170, 7
    %v172 = vsub.s32 0, %v171
    %v173 = vrot.slane %v168, %v172
    %v179 = vunpack.c.l.b16 %v164
    %v180 = vunpack.c.l.b16 %v165
    %v181 = vunpack.c.l.b16 %v166
    %v182 = vunpack.c.l.b16 %v167
    %v183 = vpack.c.b16 %v180, %v179
    %v184 = vpack.c.b16 %v182, %v181
    %v188 = vsel %vm120, %v96, 0
    %190 = vmatprep.subr.bf16.mxu0 0
    %191 = vmatpush1.bf16.msra.mxu0 %v183
    %192 = vmatprep.subr.bf16.mxu0 0
    %193 = vmatpush1.bf16.msra.mxu0 %v184
    %194 = vmatprep.subr.bf16.mxu0 0
    %195 = vmatpush1.bf16.msra.mxu0 0
    %196 = vmatprep.subr.bf16.mxu0 0
    %197 = vmatpush1.bf16.msra.mxu0 0
    %198 = vmatprep.subr.bf16.mxu0 0
    %199 = vmatpush1.bf16.msra.mxu0 0
    %200 = vmatprep.subr.bf16.mxu0 0
    %201 = vmatpush1.bf16.msra.mxu0 0
    %202 = vmatprep.subr.bf16.mxu0 0
    %203 = vmatpush1.bf16.msra.mxu0 0
    %204 = vmatprep.subr.bf16.mxu0 0
    %205 = vmatpush1.bf16.msra.mxu0 0
    %206 = vmatprep.subr.bf16.mxu0 0
    %207 = vmatpush1.bf16.msra.mxu0 0
    %208 = vmatprep.subr.bf16.mxu0 0
    %209 = vmatpush1.bf16.msra.mxu0 0
    %210 = vmatprep.subr.bf16.mxu0 0
    %211 = vmatpush1.bf16.msra.mxu0 0
    %212 = vmatprep.subr.bf16.mxu0 0
    %213 = vmatpush1.bf16.msra.mxu0 0
    %214 = vmatprep.subr.bf16.mxu0 0
    %215 = vmatpush1.bf16.msra.mxu0 0
    %216 = vmatprep.subr.bf16.mxu0 0
    %217 = vmatpush1.bf16.msra.mxu0 0
    %218 = vmatprep.subr.bf16.mxu0 0
    %219 = vmatpush1.bf16.msra.mxu0 0
    %220 = vmatprep.subr.bf16.mxu0 0
    %221 = vmatpush1.bf16.msra.mxu0 0
    %222 = vmatprep.mubr.bf16.mxu0 0
    %223 = vmatmul.mubr.bf16.gmra.mrb[0].mxu0 %v188
    %v224 = vpop.f32.mrb[0].mxu0
    %v225 = vadd.f32 %v173, %v224
    %v226 = vpop.f32.mrb[0].mxu0
    %v227 = vpop.f32.mrb[0].mxu0
    %v228 = vpop.f32.mrb[0].mxu0
    %229 = vdwg.mxu0
    %v230 = vxor.u32 %v159, 2147483648
    %v231 = vmul.f32 %v230, 1.442695
    %v232 = vpow.pop %v231
    %v233 = vadd.f32 %v232, 1.0
    %v234 = vrcp.pop %v233
    %v235 = vmul.f32 1.0, %v234
    %v236 = vmul.f32 %v235, %v225
    %v237 = vpack.c.bf16 %v236, %v236
    %v238 = vld [vmem:[#allocation10] sm:$0xf]
    %v239 = vld [vmem:[#allocation10 + $0x4] sm:$0xf]
    %v240 = vld [vmem:[#allocation10 + $0x8] sm:$0xf]
    %v241 = vld [vmem:[#allocation10 + $0xc] sm:$0xf]
    %v242 = vld [vmem:[#allocation10 + $0x10] sm:$0xf]
    %v243 = vld [vmem:[#allocation10 + $0x14] sm:$0xf]
    %v244 = vld [vmem:[#allocation10 + $0x18] sm:$0xf]
    %v245 = vld [vmem:[#allocation10 + $0x1c] sm:$0xf]
    %v246 = vld [vmem:[#allocation10 + $0x20] sm:$0xf]
    %v247 = vld [vmem:[#allocation10 + $0x24] sm:$0xf]
    %v248 = vld [vmem:[#allocation10 + $0x28] sm:$0xf]
    %v249 = vld [vmem:[#allocation10 + $0x2c] sm:$0xf]
    %v250 = vld [vmem:[#allocation10 + $0x30] sm:$0xf]
    %v251 = vld [vmem:[#allocation10 + $0x34] sm:$0xf]
    %v252 = vld [vmem:[#allocation10 + $0x38] sm:$0xf]
    %v253 = vld [vmem:[#allocation10 + $0x3c] sm:$0xf]
    %v254 = vld [vmem:[%s7] sm:$0x1]
    %v256 = vlaneseq
    %v257 = vshrl.u32 %v256, 7
    %v258 = vsub.s32 0, %v257
    %v259 = vrot.slane %v254, %v258
    %v277 = vunpack.c.l.b16 %v238
    %v278 = vunpack.c.l.b16 %v239
    %v279 = vunpack.c.l.b16 %v240
    %v280 = vunpack.c.l.b16 %v241
    %v281 = vunpack.c.l.b16 %v242
    %v282 = vunpack.c.l.b16 %v243
    %v283 = vunpack.c.l.b16 %v244
    %v284 = vunpack.c.l.b16 %v245
    %v285 = vunpack.c.l.b16 %v246
    %v286 = vunpack.c.l.b16 %v247
    %v287 = vunpack.c.l.b16 %v248
    %v288 = vunpack.c.l.b16 %v249
    %v289 = vunpack.c.l.b16 %v250
    %v290 = vunpack.c.l.b16 %v251
    %v291 = vunpack.c.l.b16 %v252
    %v292 = vunpack.c.l.b16 %v253
    %v293 = vpack.c.b16 %v278, %v277
    %v294 = vpack.c.b16 %v280, %v279
    %v295 = vpack.c.b16 %v282, %v281
    %v296 = vpack.c.b16 %v284, %v283
    %v297 = vpack.c.b16 %v286, %v285
    %v298 = vpack.c.b16 %v288, %v287
    %v299 = vpack.c.b16 %v290, %v289
    %v300 = vpack.c.b16 %v292, %v291
    %309 = vmatprep.subr.bf16.mxu0 0
    %310 = vmatpush1.bf16.msra.mxu0 %v293
    %311 = vmatprep.subr.bf16.mxu0 0
    %312 = vmatpush1.bf16.msra.mxu0 %v294
    %313 = vmatprep.subr.bf16.mxu0 0
    %314 = vmatpush1.bf16.msra.mxu0 %v295
    %315 = vmatprep.subr.bf16.mxu0 0
    %316 = vmatpush1.bf16.msra.mxu0 %v296
    %317 = vmatprep.subr.bf16.mxu0 0
    %318 = vmatpush1.bf16.msra.mxu0 %v297
    %319 = vmatprep.subr.bf16.mxu0 0
    %320 = vmatpush1.bf16.msra.mxu0 %v298
    %321 = vmatprep.subr.bf16.mxu0 0
    %322 = vmatpush1.bf16.msra.mxu0 %v299
    %323 = vmatprep.subr.bf16.mxu0 0
    %324 = vmatpush1.bf16.msra.mxu0 %v300
    %325 = vmatprep.subr.bf16.mxu0 0
    %326 = vmatpush1.bf16.msra.mxu0 0
    %327 = vmatprep.subr.bf16.mxu0 0
    %328 = vmatpush1.bf16.msra.mxu0 0
    %329 = vmatprep.subr.bf16.mxu0 0
    %330 = vmatpush1.bf16.msra.mxu0 0
    %331 = vmatprep.subr.bf16.mxu0 0
    %332 = vmatpush1.bf16.msra.mxu0 0
    %333 = vmatprep.subr.bf16.mxu0 0
    %334 = vmatpush1.bf16.msra.mxu0 0
    %335 = vmatprep.subr.bf16.mxu0 0
    %336 = vmatpush1.bf16.msra.mxu0 0
    %337 = vmatprep.subr.bf16.mxu0 0
    %338 = vmatpush1.bf16.msra.mxu0 0
    %339 = vmatprep.subr.bf16.mxu0 0
    %340 = vmatpush1.bf16.msra.mxu0 0
    %341 = vmatprep.mubr.bf16.mxu0 0
    %342 = vmatmul.mubr.bf16.gmra.mrb[0].mxu0 %v237
    %v343 = vpop.f32.mrb[0].mxu0
    %v344 = vadd.f32 %v259, %v343
    %v345 = vpop.f32.mrb[0].mxu0
    %v346 = vpop.f32.mrb[0].mxu0
    %v347 = vpop.f32.mrb[0].mxu0
    %348 = vdwg.mxu0
    %349 = vst [vmem:[#allocation11] sm:$0xff] %v344
    // Predicated region
    $region54: #{tpu_custom_call.1} parent=1 // pred_check
      _
    $region55: #{tpu_custom_call.1} parent=1 // pred_check_branch
      %351 = sbr.rel (0) target = $region57
    $region56: #{tpu_custom_call.1} parent=1 // pred_region
      %s353 = ssub.s32 128, 128
      %354 = vsyncadd [#allocation4], %s353
      %s356 = sshll.u32 [#allocation11], 4
      %s357 = int_to_ptr.vmem [resolvable:$true] %s356
      %359 = dma.vmem_to_hbm [thread:$0]  %s357, 128, %s8, [#allocation4]
    $region57: #{tpu_custom_call.1} parent=1 // pred_fallthru
      _
    // Predicated region
    $region58: #{tpu_custom_call.1} parent=1 // pred_check
      _
    $region59: #{tpu_custom_call.1} parent=1 // pred_check_branch
      %361 = sbr.rel (0) target = $region61
    $region60: #{tpu_custom_call.1} parent=1 // pred_region
      %362 = dma.done [#allocation4], 128
    $region61: #{tpu_custom_call.1} parent=1 // pred_fallthru
      _
    %363 = vsyncpa [#allocation3], 1
    %364 = vsyncpa [#allocation6], 1
    %365 = vsyncpa [#allocation9], 1
    %366 = vsyncpa [#allocation4], 1

</llo_original>
